<compile_context>
chip_gen: v7x
topology: tpu7x:2x2x1
jax: 0.10.0
libtpu: 0.0.40
codegen_flags: <defaults>
</compile_context>

<pallas_src>
import jax
import jax.numpy as jnp
from jax.experimental import pallas as pl
from jax.experimental.pallas import tpu as pltpu


def _round_up(x, m):
    return ((x + m - 1) // m) * m


def _pick_tile(dim, align, cap):
    """Return (tile, padded_dim): tile is a multiple of `align`, <= cap,
    chosen to minimize padding (tie-break: larger tile => fewer grid steps)."""
    p_min = _round_up(dim, align)
    if p_min <= cap:
        return p_min, p_min
    best_t, best_p = align, _round_up(dim, align)
    t = 2 * align
    while t <= cap:
        p = _round_up(dim, t)
        if p < best_p or (p == best_p and t > best_t):
            best_t, best_p = t, p
        t += align
    return best_t, best_p


# ----------------------------- kernels ------------------------------------


def _linear_tanh_single_kernel(x_ref, w_ref, b_ref, o_ref):
    """Single-block fast path: whole (padded) problem, no grid, no scratch."""
    y = jnp.dot(x_ref[...], w_ref[...], preferred_element_type=jnp.float32)
    y = y + b_ref[...].astype(jnp.float32)
    o_ref[...] = jnp.tanh(y).astype(o_ref.dtype)


def _linear_tanh_tiled_f32_kernel(x_ref, w_ref, b_ref, o_ref):
    """f32 output: accumulate directly into the resident output tile.

    x_ref: (tm, tk)   activations
    w_ref: (tk, tn)   weight, pre-transposed to (IN, OUT) layout
    b_ref: (1, tn)    bias
    o_ref: (tm, tn)   f32 output tile, resident across the k axis
    """
    k = pl.program_id(2)

    @pl.when(k == 0)
    def _():
        o_ref[...] = jnp.zeros_like(o_ref)

    o_ref[...] += jnp.dot(x_ref[...], w_ref[...],
                          preferred_element_type=jnp.float32)

    @pl.when(k == pl.num_programs(2) - 1)
    def _():
        o_ref[...] = jnp.tanh(o_ref[...] + b_ref[...].astype(jnp.float32))


def _linear_tanh_tiled_acc_kernel(x_ref, w_ref, b_ref, o_ref, acc_ref):
    """Narrow output dtype: accumulate in f32 scratch, cast in the epilogue."""
    k = pl.program_id(2)

    @pl.when(k == 0)
    def _():
        acc_ref[...] = jnp.zeros_like(acc_ref)

    acc_ref[...] += jnp.dot(x_ref[...], w_ref[...],
                            preferred_element_type=jnp.float32)

    @pl.when(k == pl.num_programs(2) - 1)
    def _():
        y = acc_ref[...] + b_ref[...].astype(jnp.float32)
        o_ref[...] = jnp.tanh(y).astype(o_ref.dtype)


# ----------------------------- wrapper ------------------------------------

_SUBLANE_ALIGN = {"float32": 8, "bfloat16": 16, "float16": 16, "int8": 32}


def linear_tanh(x, weight, bias, *, tm_max=256, tn_max=512, tk_max=512,
                single_tile_bytes=4 << 20):
    """y = tanh(x @ weight.T + bias); weight in PyTorch (out, in) layout."""
    B, IN = x.shape
    OUT, IN_w = weight.shape
    assert IN_w == IN, "weight must be (out_features, in_features)"

    dtype = jnp.dtype(x.dtype)
    m_align = _SUBLANE_ALIGN.get(dtype.name, 8)
    itemsize = dtype.itemsize

    # One-time transpose to (IN, OUT): MXU-friendly RHS layout (K on sublanes).
    # Constant-folded by XLA when the weight is reused across calls.
    w_t = weight.T

    # Minimal lane/sublane-aligned padded sizes.
    bp_min = _round_up(B, m_align)
    inp_min = _round_up(IN, 128)
    outp_min = _round_up(OUT, 128)

    # ---------------- single-tile fast path ----------------
    total_bytes = (bp_min * inp_min + inp_min * outp_min +
                   bp_min * outp_min + outp_min) * itemsize
    if total_bytes <= single_tile_bytes:
        xp = x if (bp_min == B and inp_min == IN) else jnp.pad(
            x, ((0, bp_min - B), (0, inp_min - IN)))
        wp = w_t if (inp_min == IN and outp_min == OUT) else jnp.pad(
            w_t, ((0, inp_min - IN), (0, outp_min - OUT)))
        bp = bias if outp_min == OUT else jnp.pad(bias, (0, outp_min - OUT))

        out_p = pl.pallas_call(
            _linear_tanh_single_kernel,
            out_shape=jax.ShapeDtypeStruct((bp_min, outp_min), x.dtype),
        )(xp, wp, bp.reshape(1, outp_min))
        return out_p[:B, :OUT]

    # ---------------- tiled path ----------------
    tm, Bp = _pick_tile(B, m_align, tm_max)
    tn, OUTp = _pick_tile(OUT, 128, tn_max)
    tk, INp = _pick_tile(IN, 128, tk_max)

    xp = x if (Bp == B and INp == IN) else jnp.pad(
        x, ((0, Bp - B), (0, INp - IN)))
    wp = w_t if (INp == IN and OUTp == OUT) else jnp.pad(
        w_t, ((0, INp - IN), (0, OUTp - OUT)))
    bp = bias if OUTp == OUT else jnp.pad(bias, (0, OUTp - OUT))
    b2d = bp.reshape(1, OUTp)

    grid = (Bp // tm, OUTp // tn, INp // tk)

    # Roughly account for the re-streaming of x (once per N tile) and W
    # (once per M tile); advisory only.
    cost = pl.CostEstimate(
        flops=2 * Bp * INp * OUTp,
        transcendentals=Bp * OUTp,
        bytes_accessed=(Bp * INp * grid[1] + INp * OUTp * grid[0]
                        + Bp * OUTp + OUTp) * itemsize,
    )

    in_specs = [
        pl.BlockSpec((tm, tk), lambda i, j, k: (i, k)),   # x
        pl.BlockSpec((tk, tn), lambda i, j, k: (k, j)),   # weight (IN, OUT)
        pl.BlockSpec((1, tn), lambda i, j, k: (0, j)),    # bias
    ]
    out_spec = pl.BlockSpec((tm, tn), lambda i, j, k: (i, j))

    if dtype == jnp.dtype(jnp.float32):
        kernel = _linear_tanh_tiled_f32_kernel
        scratch_shapes = []          # accumulate directly into o_ref
    else:
        kernel = _linear_tanh_tiled_acc_kernel
        scratch_shapes = [pltpu.VMEM((tm, tn), jnp.float32)]

    out_p = pl.pallas_call(
        kernel,
        out_shape=jax.ShapeDtypeStruct((Bp, OUTp), x.dtype),
        grid=grid,
        in_specs=in_specs,
        out_specs=out_spec,
        scratch_shapes=scratch_shapes,
        compiler_params=pltpu.CompilerParams(
            dimension_semantics=("parallel", "parallel", "arbitrary")),
        cost_estimate=cost,
    )(xp, wp, b2d)

    return out_p[:B, :OUT]


# ------------------------------- demo --------------------------------------

if __name__ == "__main__":
    key = jax.random.PRNGKey(0)

    # Case 1: small shapes consistent with the module's forward (Linear+tanh,
    # x of shape (batch, in_features)); exercises the single-tile fast path.
    batch, in_features, out_features = 8, 300, 16
    kx, kw, kb, key = (*jax.random.split(key, 3), key)
    x = jax.random.normal(kx, (batch, in_features), dtype=jnp.float32)
    bound = 1.0 / (in_features ** 0.5)
    weight = jax.random.uniform(kw, (out_features, in_features),
                                minval=-bound, maxval=bound, dtype=jnp.float32)
    bias = jax.random.uniform(kb, (out_features,),
                              minval=-bound, maxval=bound, dtype=jnp.float32)

    out = linear_tanh(x, weight, bias)
    jax.block_until_ready(out)
    ref = jnp.tanh(x @ weight.T + bias)
    assert out.shape == (batch, out_features)
    assert jnp.allclose(out, ref, atol=2e-5, rtol=2e-5)

    # Case 2: a larger shape that exercises the tiled (M, N, K) grid path
    # (force the tiled path by shrinking the fast-path budget).
    B2, IN2, OUT2 = 128, 1024, 512
    k1, k2, k3 = jax.random.split(key, 3)
    x2 = jax.random.normal(k1, (B2, IN2), dtype=jnp.float32)
    bound2 = 1.0 / (IN2 ** 0.5)
    w2 = jax.random.uniform(k2, (OUT2, IN2), minval=-bound2, maxval=bound2,
                            dtype=jnp.float32)
    b2 = jax.random.uniform(k3, (OUT2,), minval=-bound2, maxval=bound2,
                            dtype=jnp.float32)

    out2 = linear_tanh(x2, w2, b2, single_tile_bytes=0)
    jax.block_until_ready(out2)
    ref2 = jnp.tanh(x2 @ w2.T + b2)
    assert out2.shape == (B2, OUT2)
    assert jnp.allclose(out2, ref2, atol=2e-4, rtol=2e-4)

    print("KERNEL_OK")
</pallas_src>

<mosaic_0001>
module attributes {stable_mosaic.version = 11 : i64} {
  func.func @_linear_tanh_single_kernel(%arg0: memref<8x384xf32, #tpu.memory_space<vmem>>, %arg1: memref<384x128xf32, #tpu.memory_space<vmem>>, %arg2: memref<1x128xf32, #tpu.memory_space<vmem>>, %arg3: memref<8x128xf32, #tpu.memory_space<vmem>>) attributes {dimension_semantics = [], scalar_prefetch = 0 : i64, scratch_operands = 0 : i64, tpu.core_type = #tpu.core_type<tc>} {
    %c0 = arith.constant 0 : index
    %c0_0 = arith.constant 0 : index
    %0 = vector.load %arg0[%c0, %c0_0] : memref<8x384xf32, #tpu.memory_space<vmem>>, vector<8x384xf32>
    %c0_1 = arith.constant 0 : index
    %c0_2 = arith.constant 0 : index
    %1 = vector.load %arg1[%c0_1, %c0_2] : memref<384x128xf32, #tpu.memory_space<vmem>>, vector<384x128xf32>
    %cst = arith.constant dense<0.000000e+00> : vector<8x128xf32>
    %2 = tpu.matmul %0, %1, %cst {dimension_numbers = #tpu.dot_dimension_numbers<[1], [0], [0], [1], [0, 0, 1, 1], [], []>} : vector<8x384xf32>, vector<384x128xf32>, vector<8x128xf32> -> vector<8x128xf32>
    %c0_3 = arith.constant 0 : index
    %c0_4 = arith.constant 0 : index
    %3 = vector.load %arg2[%c0_3, %c0_4] : memref<1x128xf32, #tpu.memory_space<vmem>>, vector<1x128xf32>
    %4 = vector.broadcast %3 : vector<1x128xf32> to vector<8x128xf32>
    %5 = arith.addf %2, %4 : vector<8x128xf32>
    %6 = math.tanh %5 : vector<8x128xf32>
    %c0_5 = arith.constant 0 : index
    %c0_6 = arith.constant 0 : index
    %7 = vector.load %arg3[%c0_5, %c0_6] : memref<8x128xf32, #tpu.memory_space<vmem>>, vector<8x128xf32>
    tpu.vector_store %arg3[%c0_5, %c0_6], %6 {strides = array<i32>} : memref<8x128xf32, #tpu.memory_space<vmem>>, vector<8x128xf32>,
    return
  }
}

</mosaic_0001>

<llo_original>
// kernel: tpu_custom_call.1
$region0: #{tpu_custom_call.1}
  #allocation0 [shape = 'u32[]', space=smem, size = 0x4, offset = 0x4, fixed_abs, tag = 'smem constant byte address 0x4 - core index']
  #allocation1 [shape = 'u32[144,128]{1,0:T(1,128)}', space=vmem, size = 0x12000, scoped, tag = 'internal scratch']
  %s0 = inlined_call_operand.hbm [shape: f32[8,384], index: 0, kind: input, shape index: {}]
  %s1 = inlined_call_operand.hbm [shape: f32[384,128], index: 1, kind: input, shape index: {}]
  %s2 = inlined_call_operand.vmem [shape: f32[1,128], index: 2, kind: input, shape index: {}]
  %s3 = inlined_call_operand.hbm [shape: f32[8,128], index: 3, kind: output, shape index: {}]
  %s4 = sld [smem:[#allocation0]]
  $region30: #{tpu_custom_call.1} parent=0
    _
  %s6 = ssub.s32 1, %s4
  %s7 = scalar_select 0, %s6, %s4
  $region1: #{tpu_custom_call.1} parent=0
    #allocation2 [shape = 'u8[12288]{0}', space=vmem, size = 0x3000, scoped, tag = 'input window, operand 0, single buffered']
    #allocation3 [shape = 's32[1]{0}', space=sflag, size = 0x4, scoped, tag = 'scoped memory for tpu_custom_call.1']
    #allocation4 [shape = 's32[1]{0}', space=sflag, size = 0x4, scoped, tag = 'scoped memory for tpu_custom_call.1']
    #allocation5 [shape = 'u8[196608]{0}', space=vmem, size = 0x30000, scoped, tag = 'input window, operand 1, single buffered']
    #allocation6 [shape = 's32[1]{0}', space=sflag, size = 0x4, scoped, tag = 'scoped memory for tpu_custom_call.1']
    #allocation7 [shape = 'u8[4096]{0}', space=vmem, size = 0x1000, scoped, tag = 'output window, operand 0, single buffered']
    %8 = vsyncpa [#allocation3], 0
    %9 = vsyncpa [#allocation6], 0
    %10 = vsyncpa [#allocation4], 0
    // Predicated region
    $region2: #{tpu_custom_call.1} parent=1 // pred_check
      _
    $region3: #{tpu_custom_call.1} parent=1 // pred_check_branch
      %12 = sbr.rel (0) target = $region5
    $region4: #{tpu_custom_call.1} parent=1 // pred_region
      %s14 = ssub.s32 384, 384
      %15 = vsyncadd [#allocation3], %s14
      %s17 = sshll.u32 [#allocation2], 4
      %s18 = int_to_ptr.vmem [resolvable:$true] %s17
      %20 = dma.hbm_to_vmem [thread:$0]  %s0, 384, %s18, [#allocation3]
    $region5: #{tpu_custom_call.1} parent=1 // pred_fallthru
      _
    // Predicated region
    $region6: #{tpu_custom_call.1} parent=1 // pred_check
      _
    $region7: #{tpu_custom_call.1} parent=1 // pred_check_branch
      %22 = sbr.rel (0) target = $region9
    $region8: #{tpu_custom_call.1} parent=1 // pred_region
      %s24 = ssub.s32 6144, 6144
      %25 = vsyncadd [#allocation6], %s24
      %s26 = sshll.u32 [#allocation5], 4
      %s27 = int_to_ptr.vmem [resolvable:$true] %s26
      %32 = dma.hbm_to_vmem [thread:$0]  %s1, 6144, %s27, [#allocation6], 128, 128, 8
    $region9: #{tpu_custom_call.1} parent=1 // pred_fallthru
      _
    // Predicated region
    $region10: #{tpu_custom_call.1} parent=1 // pred_check
      _
    $region11: #{tpu_custom_call.1} parent=1 // pred_check_branch
      %34 = sbr.rel (0) target = $region13
    $region12: #{tpu_custom_call.1} parent=1 // pred_region
      _
    $region13: #{tpu_custom_call.1} parent=1 // pred_fallthru
      _
    // Predicated region
    $region14: #{tpu_custom_call.1} parent=1 // pred_check
      _
    $region15: #{tpu_custom_call.1} parent=1 // pred_check_branch
      %36 = sbr.rel (0) target = $region17
    $region16: #{tpu_custom_call.1} parent=1 // pred_region
      %37 = dma.done [#allocation3], 384
    $region17: #{tpu_custom_call.1} parent=1 // pred_fallthru
      _
    // Predicated region
    $region18: #{tpu_custom_call.1} parent=1 // pred_check
      _
    $region19: #{tpu_custom_call.1} parent=1 // pred_check_branch
      %39 = sbr.rel (0) target = $region21
    $region20: #{tpu_custom_call.1} parent=1 // pred_region
      %40 = dma.done [#allocation6], 6144
    $region21: #{tpu_custom_call.1} parent=1 // pred_fallthru
      _
    %v41 = vld [vmem:[#allocation2] sm:$0xff]
    %v42 = vld [vmem:[#allocation2 + $0x8] sm:$0xff]
    %v43 = vld [vmem:[#allocation2 + $0x10] sm:$0xff]
    %v44 = vld [vmem:[#allocation5] sm:$0xff]
    %v45 = vld [vmem:[#allocation5 + $0x8] sm:$0xff]
    %v46 = vld [vmem:[#allocation5 + $0x10] sm:$0xff]
    %v47 = vld [vmem:[#allocation5 + $0x18] sm:$0xff]
    %v48 = vld [vmem:[#allocation5 + $0x20] sm:$0xff]
    %v49 = vld [vmem:[#allocation5 + $0x28] sm:$0xff]
    %v50 = vld [vmem:[#allocation5 + $0x30] sm:$0xff]
    %v51 = vld [vmem:[#allocation5 + $0x38] sm:$0xff]
    %v52 = vld [vmem:[#allocation5 + $0x40] sm:$0xff]
    %v53 = vld [vmem:[#allocation5 + $0x48] sm:$0xff]
    %v54 = vld [vmem:[#allocation5 + $0x50] sm:$0xff]
    %v55 = vld [vmem:[#allocation5 + $0x58] sm:$0xff]
    %v56 = vld [vmem:[#allocation5 + $0x60] sm:$0xff]
    %v57 = vld [vmem:[#allocation5 + $0x68] sm:$0xff]
    %v58 = vld [vmem:[#allocation5 + $0x70] sm:$0xff]
    %v59 = vld [vmem:[#allocation5 + $0x78] sm:$0xff]
    %v60 = vld [vmem:[#allocation5 + $0x80] sm:$0xff]
    %v61 = vld [vmem:[#allocation5 + $0x88] sm:$0xff]
    %v62 = vld [vmem:[#allocation5 + $0x90] sm:$0xff]
    %v63 = vld [vmem:[#allocation5 + $0x98] sm:$0xff]
    %v64 = vld [vmem:[#allocation5 + $0xa0] sm:$0xff]
    %v65 = vld [vmem:[#allocation5 + $0xa8] sm:$0xff]
    %v66 = vld [vmem:[#allocation5 + $0xb0] sm:$0xff]
    %v67 = vld [vmem:[#allocation5 + $0xb8] sm:$0xff]
    %v68 = vld [vmem:[#allocation5 + $0xc0] sm:$0xff]
    %v69 = vld [vmem:[#allocation5 + $0xc8] sm:$0xff]
    %v70 = vld [vmem:[#allocation5 + $0xd0] sm:$0xff]
    %v71 = vld [vmem:[#allocation5 + $0xd8] sm:$0xff]
    %v72 = vld [vmem:[#allocation5 + $0xe0] sm:$0xff]
    %v73 = vld [vmem:[#allocation5 + $0xe8] sm:$0xff]
    %v74 = vld [vmem:[#allocation5 + $0xf0] sm:$0xff]
    %v75 = vld [vmem:[#allocation5 + $0xf8] sm:$0xff]
    %v76 = vld [vmem:[#allocation5 + $0x100] sm:$0xff]
    %v77 = vld [vmem:[#allocation5 + $0x108] sm:$0xff]
    %v78 = vld [vmem:[#allocation5 + $0x110] sm:$0xff]
    %v79 = vld [vmem:[#allocation5 + $0x118] sm:$0xff]
    %v80 = vld [vmem:[#allocation5 + $0x120] sm:$0xff]
    %v81 = vld [vmem:[#allocation5 + $0x128] sm:$0xff]
    %v82 = vld [vmem:[#allocation5 + $0x130] sm:$0xff]
    %v83 = vld [vmem:[#allocation5 + $0x138] sm:$0xff]
    %v84 = vld [vmem:[#allocation5 + $0x140] sm:$0xff]
    %v85 = vld [vmem:[#allocation5 + $0x148] sm:$0xff]
    %v86 = vld [vmem:[#allocation5 + $0x150] sm:$0xff]
    %v87 = vld [vmem:[#allocation5 + $0x158] sm:$0xff]
    %v88 = vld [vmem:[#allocation5 + $0x160] sm:$0xff]
    %v89 = vld [vmem:[#allocation5 + $0x168] sm:$0xff]
    %v90 = vld [vmem:[#allocation5 + $0x170] sm:$0xff]
    %v91 = vld [vmem:[#allocation5 + $0x178] sm:$0xff]
    %v92 = vld [vmem:[%s2] sm:$0x1]
    %v94 = vlaneseq
    %v95 = vshrl.u32 %v94, 7
    %v96 = vsub.s32 0, %v95
    %v97 = vrot.slane %v92, %v96
    %99 = vmatprep.subr.mxu0 0.0
    %100 = vmatpush1.msra.mxu0 %v44
    %101 = vmatprep.subr.mxu0 0.0
    %102 = vmatpush1.msra.mxu0 %v45
    %103 = vmatprep.subr.mxu0 0.0
    %104 = vmatpush1.msra.mxu0 %v46
    %105 = vmatprep.subr.mxu0 0.0
    %106 = vmatpush1.msra.mxu0 %v47
    %107 = vmatprep.subr.mxu0 0.0
    %108 = vmatpush1.msra.mxu0 %v48
    %109 = vmatprep.subr.mxu0 0.0
    %110 = vmatpush1.msra.mxu0 %v49
    %111 = vmatprep.subr.mxu0 0.0
    %112 = vmatpush1.msra.mxu0 %v50
    %113 = vmatprep.subr.mxu0 0.0
    %114 = vmatpush1.msra.mxu0 %v51
    %115 = vmatprep.subr.mxu0 0.0
    %116 = vmatpush1.msra.mxu0 %v52
    %117 = vmatprep.subr.mxu0 0.0
    %118 = vmatpush1.msra.mxu0 %v53
    %119 = vmatprep.subr.mxu0 0.0
    %120 = vmatpush1.msra.mxu0 %v54
    %121 = vmatprep.subr.mxu0 0.0
    %122 = vmatpush1.msra.mxu0 %v55
    %123 = vmatprep.subr.mxu0 0.0
    %124 = vmatpush1.msra.mxu0 %v56
    %125 = vmatprep.subr.mxu0 0.0
    %126 = vmatpush1.msra.mxu0 %v57
    %127 = vmatprep.subr.mxu0 0.0
    %128 = vmatpush1.msra.mxu0 %v58
    %129 = vmatprep.subr.mxu0 0.0
    %130 = vmatpush1.msra.mxu0 %v59
    %131 = vmatprep.subr.mxu0 0.0
    %132 = vmatpush1.msra.mxu0 %v60
    %133 = vmatprep.subr.mxu0 0.0
    %134 = vmatpush1.msra.mxu0 %v61
    %135 = vmatprep.subr.mxu0 0.0
    %136 = vmatpush1.msra.mxu0 %v62
    %137 = vmatprep.subr.mxu0 0.0
    %138 = vmatpush1.msra.mxu0 %v63
    %139 = vmatprep.subr.mxu0 0.0
    %140 = vmatpush1.msra.mxu0 %v64
    %141 = vmatprep.subr.mxu0 0.0
    %142 = vmatpush1.msra.mxu0 %v65
    %143 = vmatprep.subr.mxu0 0.0
    %144 = vmatpush1.msra.mxu0 %v66
    %145 = vmatprep.subr.mxu0 0.0
    %146 = vmatpush1.msra.mxu0 %v67
    %147 = vmatprep.subr.mxu0 0.0
    %148 = vmatpush1.msra.mxu0 %v68
    %149 = vmatprep.subr.mxu0 0.0
    %150 = vmatpush1.msra.mxu0 %v69
    %151 = vmatprep.subr.mxu0 0.0
    %152 = vmatpush1.msra.mxu0 %v70
    %153 = vmatprep.subr.mxu0 0.0
    %154 = vmatpush1.msra.mxu0 %v71
    %155 = vmatprep.subr.mxu0 0.0
    %156 = vmatpush1.msra.mxu0 %v72
    %157 = vmatprep.subr.mxu0 0.0
    %158 = vmatpush1.msra.mxu0 %v73
    %159 = vmatprep.subr.mxu0 0.0
    %160 = vmatpush1.msra.mxu0 %v74
    %161 = vmatprep.subr.mxu0 0.0
    %162 = vmatpush1.msra.mxu0 %v75
    %163 = vmatprep.mubr.f32.mxu0 %v42
    %164 = vmatmul.mubr.f32.gmra.mrb[0].mxu0 %v41
    %v165 = vpop.f32.mrb[0].mxu0
    %v166 = vadd.f32 %v97, %v165
    %v167 = vpop.f32.mrb[0].mxu0
    %168 = vdwg.mxu0
    %169 = vmatprep.subr.mxu0 0.0
    %170 = vmatpush1.msra.mxu0 %v76
    %171 = vmatprep.subr.mxu0 0.0
    %172 = vmatpush1.msra.mxu0 %v77
    %173 = vmatprep.subr.mxu0 0.0
    %174 = vmatpush1.msra.mxu0 %v78
    %175 = vmatprep.subr.mxu0 0.0
    %176 = vmatpush1.msra.mxu0 %v79
    %177 = vmatprep.subr.mxu0 0.0
    %178 = vmatpush1.msra.mxu0 %v80
    %179 = vmatprep.subr.mxu0 0.0
    %180 = vmatpush1.msra.mxu0 %v81
    %181 = vmatprep.subr.mxu0 0.0
    %182 = vmatpush1.msra.mxu0 %v82
    %183 = vmatprep.subr.mxu0 0.0
    %184 = vmatpush1.msra.mxu0 %v83
    %185 = vmatprep.subr.mxu0 0.0
    %186 = vmatpush1.msra.mxu0 %v84
    %187 = vmatprep.subr.mxu0 0.0
    %188 = vmatpush1.msra.mxu0 %v85
    %189 = vmatprep.subr.mxu0 0.0
    %190 = vmatpush1.msra.mxu0 %v86
    %191 = vmatprep.subr.mxu0 0.0
    %192 = vmatpush1.msra.mxu0 %v87
    %193 = vmatprep.subr.mxu0 0.0
    %194 = vmatpush1.msra.mxu0 %v88
    %195 = vmatprep.subr.mxu0 0.0
    %196 = vmatpush1.msra.mxu0 %v89
    %197 = vmatprep.subr.mxu0 0.0
    %198 = vmatpush1.msra.mxu0 %v90
    %199 = vmatprep.subr.mxu0 0.0
    %200 = vmatpush1.msra.mxu0 %v91
    %201 = vmatprep.subr.mxu0 0.0
    %202 = vmatpush1.msra.mxu0 0.0
    %203 = vmatprep.subr.mxu0 0.0
    %204 = vmatpush1.msra.mxu0 0.0
    %205 = vmatprep.subr.mxu0 0.0
    %206 = vmatpush1.msra.mxu0 0.0
    %207 = vmatprep.subr.mxu0 0.0
    %208 = vmatpush1.msra.mxu0 0.0
    %209 = vmatprep.subr.mxu0 0.0
    %210 = vmatpush1.msra.mxu0 0.0
    %211 = vmatprep.subr.mxu0 0.0
    %212 = vmatpush1.msra.mxu0 0.0
    %213 = vmatprep.subr.mxu0 0.0
    %214 = vmatpush1.msra.mxu0 0.0
    %215 = vmatprep.subr.mxu0 0.0
    %216 = vmatpush1.msra.mxu0 0.0
    %217 = vmatprep.subr.mxu0 0.0
    %218 = vmatpush1.msra.mxu0 0.0
    %219 = vmatprep.subr.mxu0 0.0
    %220 = vmatpush1.msra.mxu0 0.0
    %221 = vmatprep.subr.mxu0 0.0
    %222 = vmatpush1.msra.mxu0 0.0
    %223 = vmatprep.subr.mxu0 0.0
    %224 = vmatpush1.msra.mxu0 0.0
    %225 = vmatprep.subr.mxu0 0.0
    %226 = vmatpush1.msra.mxu0 0.0
    %227 = vmatprep.subr.mxu0 0.0
    %228 = vmatpush1.msra.mxu0 0.0
    %229 = vmatprep.subr.mxu0 0.0
    %230 = vmatpush1.msra.mxu0 0.0
    %231 = vmatprep.subr.mxu0 0.0
    %232 = vmatpush1.msra.mxu0 0.0
    %233 = vmatprep.mubr.f32.mxu0 0.0
    %234 = vmatmul.mubr.f32.gmra.mrb[0].mxu0 %v43
    %v235 = vpop.f32.mrb[0].mxu0
    %v236 = vadd.f32 %v166, %v235
    %v237 = vpop.f32.mrb[0].mxu0
    %238 = vdwg.mxu0
    %v239 = vtanh.pop %v236
    %240 = vst [vmem:[#allocation7] sm:$0xff] %v239
    // Predicated region
    $region22: #{tpu_custom_call.1} parent=1 // pred_check
      _
    $region23: #{tpu_custom_call.1} parent=1 // pred_check_branch
      %242 = sbr.rel (0) target = $region25
    $region24: #{tpu_custom_call.1} parent=1 // pred_region
      %s244 = ssub.s32 128, 128
      %245 = vsyncadd [#allocation4], %s244
      %s247 = sshll.u32 [#allocation7], 4
      %s248 = int_to_ptr.vmem [resolvable:$true] %s247
      %250 = dma.vmem_to_hbm [thread:$0]  %s248, 128, %s3, [#allocation4]
    $region25: #{tpu_custom_call.1} parent=1 // pred_fallthru
      _
    // Predicated region
    $region26: #{tpu_custom_call.1} parent=1 // pred_check
      _
    $region27: #{tpu_custom_call.1} parent=1 // pred_check_branch
      %252 = sbr.rel (0) target = $region29
    $region28: #{tpu_custom_call.1} parent=1 // pred_region
      %253 = dma.done [#allocation4], 128
    $region29: #{tpu_custom_call.1} parent=1 // pred_fallthru
      _
    %254 = vsyncpa [#allocation3], 1
    %255 = vsyncpa [#allocation6], 1
    %256 = vsyncpa [#allocation4], 1

</llo_original>
